<compile_context>
chip_gen: v6e
topology: v6e:2x2x1
jax: 0.10.0
libtpu: 0.0.40
codegen_flags: <defaults>
</compile_context>

<pallas_src>
import functools
import math

import jax
import jax.numpy as jnp
from jax.experimental import pallas as pl
from jax.experimental.pallas import tpu as pltpu

LN_EPS = 1e-12  # base_model.config.layer_norm_eps (BERT default)


def _vmem_limit_bytes():
    # ~3/4 of per-core VMEM: ~48 MiB on v7x (64 MiB), ~96 MiB on v5e/v6e (128 MiB).
    try:
        cap = pltpu.get_tpu_info().vmem_capacity_bytes
        return max(32 * 1024 * 1024, int(cap) * 3 // 4)
    except Exception:
        return 48 * 1024 * 1024


# --------------------------------------------------------------------------
# Kernel 1: bidirectional single-layer LSTM (batch_first, hidden = D//2 / dir)
#   - grid over batch blocks (marked "parallel"), Bb batch rows per step
#   - rows inside a block are ordered (t, b_local)  ->  flat index t*Bb + b
# --------------------------------------------------------------------------
def _bilstm_kernel(x_ref, wih_f_ref, whh_f_ref, b_f_ref,
                   wih_b_ref, whh_b_ref, b_b_ref, out_ref,
                   xgf, xgb, hf, cf, hb, cb, *, seq_len, batch_blk):
    H = hf.shape[1]
    x = x_ref[...]                                                   # (T*Bb, D) bf16

    # Hoisted input projections: one full-size MXU matmul per direction.
    # Stored in bf16 scratch (halves VMEM vs f32); b_* = bias_ih + bias_hh.
    xgf[...] = (jnp.dot(x, wih_f_ref[...], preferred_element_type=jnp.float32)
                + b_f_ref[...]).astype(jnp.bfloat16)
    xgb[...] = (jnp.dot(x, wih_b_ref[...], preferred_element_type=jnp.float32)
                + b_b_ref[...]).astype(jnp.bfloat16)

    hf[...] = jnp.zeros_like(hf)
    cf[...] = jnp.zeros_like(cf)
    hb[...] = jnp.zeros_like(hb)
    cb[...] = jnp.zeros_like(cb)

    def gates(gsum, c_prev):                                         # gsum: (Bb, 4H) f32
        i = jax.nn.sigmoid(gsum[:, 0:H])
        f = jax.nn.sigmoid(gsum[:, H:2 * H])
        g = jnp.tanh(gsum[:, 2 * H:3 * H])
        o = jax.nn.sigmoid(gsum[:, 3 * H:4 * H])
        c_new = f * c_prev + i * g
        h_new = o * jnp.tanh(c_new)
        return h_new, c_new

    # One fused time loop: forward processes t, backward processes T-1-t.
    @pl.loop(0, seq_len)
    def _(t):
        row_f = pl.multiple_of(t * batch_blk, 8)
        row_b = pl.multiple_of((seq_len - 1 - t) * batch_blk, 8)

        gf = xgf[pl.ds(row_f, batch_blk), :].astype(jnp.float32) + jnp.dot(
            hf[...].astype(jnp.bfloat16), whh_f_ref[...],
            preferred_element_type=jnp.float32)
        h_new, c_new = gates(gf, cf[...])
        hf[...] = h_new
        cf[...] = c_new
        out_ref[pl.ds(row_f, batch_blk), 0:H] = h_new.astype(jnp.bfloat16)

        gb = xgb[pl.ds(row_b, batch_blk), :].astype(jnp.float32) + jnp.dot(
            hb[...].astype(jnp.bfloat16), whh_b_ref[...],
            preferred_element_type=jnp.float32)
        h_new_b, c_new_b = gates(gb, cb[...])
        hb[...] = h_new_b
        cb[...] = c_new_b
        out_ref[pl.ds(row_b, batch_blk), H:2 * H] = h_new_b.astype(jnp.bfloat16)


def bilstm(x, wih_f, whh_f, b_f, wih_b, whh_b, b_b, *, batch_block=8):
    B, T, D = x.shape
    H = D // 2
    Bb = batch_block
    assert Bb % 8 == 0, "batch_block must be a multiple of 8 (sublane-dense)"

    # Pad batch to a multiple of Bb (zeros -> LSTM of zeros, sliced off below).
    B_pad = -(-B // Bb) * Bb
    if B_pad != B:
        x = jnp.pad(x, ((0, B_pad - B), (0, 0), (0, 0)))
    n_blk = B_pad // Bb

    # (B_pad, T, D) -> (n_blk, T*Bb, D) with flat row = t*Bb + b_local
    x_r = (x.reshape(n_blk, Bb, T, D).transpose(0, 2, 1, 3)
             .reshape(n_blk, T * Bb, D).astype(jnp.bfloat16))

    def wspec(w):
        nd = w.ndim
        return pl.BlockSpec(w.shape, lambda i, nd=nd: (0,) * nd)

    kernel = functools.partial(_bilstm_kernel, seq_len=T, batch_blk=Bb)
    out = pl.pallas_call(
        kernel,
        out_shape=jax.ShapeDtypeStruct((n_blk, T * Bb, D), jnp.bfloat16),
        grid=(n_blk,),
        in_specs=[
            pl.BlockSpec((None, T * Bb, D), lambda i: (i, 0, 0)),
            wspec(wih_f), wspec(whh_f), wspec(b_f),
            wspec(wih_b), wspec(whh_b), wspec(b_b),
        ],
        out_specs=pl.BlockSpec((None, T * Bb, D), lambda i: (i, 0, 0)),
        scratch_shapes=[
            pltpu.VMEM((T * Bb, 4 * H), jnp.bfloat16),  # fwd input-proj (bf16)
            pltpu.VMEM((T * Bb, 4 * H), jnp.bfloat16),  # bwd input-proj (bf16)
            pltpu.VMEM((Bb, H), jnp.float32),           # h fwd
            pltpu.VMEM((Bb, H), jnp.float32),           # c fwd
            pltpu.VMEM((Bb, H), jnp.float32),           # h bwd
            pltpu.VMEM((Bb, H), jnp.float32),           # c bwd
        ],
        compiler_params=pltpu.CompilerParams(
            dimension_semantics=("parallel",),
            vmem_limit_bytes=_vmem_limit_bytes()),
    )(x_r, wih_f, whh_f, b_f, wih_b, whh_b, b_b)

    out = (out.reshape(n_blk, T, Bb, D).transpose(0, 2, 1, 3)
              .reshape(B_pad, T, D))
    return out[:B]                                                   # (B, T, D) bf16


# --------------------------------------------------------------------------
# Kernel 2 (fused): span mean-pool (batched masked matmul) + LayerNorm
#   + BertAttention(relative_key) + BertSelfOutput residual LayerNorm
#   + classifier (lane-padded output).  B_blk batch elements per grid step;
#   all big matmuls run on the flattened (B_blk*S, D) slab.
# --------------------------------------------------------------------------
def _span_head_kernel(x_ref, head_ref, tail_ref, maskb_ref, dist_ref,
                      ln1_g, ln1_b, wq3, bq3, wk3, bk3, wv3, bv3, wo3, bo,
                      ln2_g, ln2_b, wc, bc, out_ref, rel_scr,
                      *, num_heads, head_dim, b_blk):
    Bk, S, l_pad = out_ref.shape
    T = x_ref.shape[1]
    D = x_ref.shape[2]
    w_pad = dist_ref.shape[1]
    M = Bk * S

    x = x_ref[...]                                                   # (Bk, T, D) bf16
    head = head_ref[...]                                             # (Bk, S, 1) int32
    tail = tail_ref[...]                                             # (Bk, S, 1) int32

    # --- span mean pooling: batched masked (S, T) x (T, D) MXU matmul ---
    t_idx = jax.lax.broadcasted_iota(jnp.int32, (Bk, S, T), 2)
    span_mask = (t_idx >= head + 1) & (t_idx < tail)
    mask_bf = span_mask.astype(jnp.bfloat16)
    cnt = jnp.maximum((tail - head - 1).astype(jnp.float32), 1.0)    # guard len-0 spans
    inv_cnt = pl.reciprocal(cnt, approx=True)                        # EUP slot
    pooled = jnp.einsum('bst,btd->bsd', mask_bf, x,
                        preferred_element_type=jnp.float32) * inv_cnt  # (Bk,S,D) f32

    # --- LayerNorm over span features, flattened to (M, D) ---
    pooled = pooled.reshape(M, D)
    mu = jnp.mean(pooled, axis=-1, keepdims=True)
    var = jnp.mean(jnp.square(pooled - mu), axis=-1, keepdims=True)
    feat = (pooled - mu) * jax.lax.rsqrt(var + LN_EPS) * ln1_g[...] + ln1_b[...]
    fb = feat.astype(jnp.bfloat16)                                   # (M, D)

    mask_bias = maskb_ref[...]                                       # (Bk, 1, S)
    inv_sqrt = 1.0 / math.sqrt(head_dim)

    attn_out = jnp.zeros((M, D), jnp.float32)
    for h in range(num_heads):
        # Per-head projections on the flat slab; weights pre-split per head so
        # every operand starts at lane offset 0.
        qh = jnp.dot(fb, wq3[h], preferred_element_type=jnp.float32) + bq3[h]
        kh = jnp.dot(fb, wk3[h], preferred_element_type=jnp.float32) + bk3[h]
        vh = jnp.dot(fb, wv3[h], preferred_element_type=jnp.float32) + bv3[h]
        qb = qh.astype(jnp.bfloat16)

        # relative_key scores: rel[i, j] = q_i . dist_emb[i - j + max_pos - 1].
        # dist_ref holds the (reversed, lane-padded) distance band so
        #   a_rev[i, m] = q_i . band[S-1-m distance]  and  rel[i, j] = a_rev[i, j+S-1-i]
        # -> per-row strided roll + lane slice, extracted per batch row.
        a_rev = jnp.dot(qb, dist_ref[...], preferred_element_type=jnp.float32)  # (M, w_pad)
        for b in range(b_blk):
            rel_scr[b] = pltpu.roll(a_rev[b * S:(b + 1) * S, :],
                                    w_pad - (S - 1), 1,
                                    stride=1, stride_axis=0)[:, :S]

        q3 = qb.reshape(Bk, S, head_dim)
        k3 = kh.astype(jnp.bfloat16).reshape(Bk, S, head_dim)
        v3 = vh.astype(jnp.bfloat16).reshape(Bk, S, head_dim)
        scores = jnp.einsum('bsd,btd->bst', q3, k3,
                            preferred_element_type=jnp.float32)      # (Bk, S, S)
        scores = (scores + rel_scr[...]) * inv_sqrt + mask_bias
        # TODO(synk): attention_probs dropout is identity (inference semantics).
        probs = jax.nn.softmax(scores, axis=-1)
        ctx = jnp.einsum('bst,btd->bsd', probs.astype(jnp.bfloat16), v3,
                         preferred_element_type=jnp.float32)         # (Bk, S, hd)
        # fold head directly into the output projection (no concat)
        attn_out = attn_out + jnp.dot(
            ctx.reshape(M, head_dim).astype(jnp.bfloat16), wo3[h],
            preferred_element_type=jnp.float32)

    # --- BertSelfOutput: dense bias + residual + LayerNorm ---
    res = attn_out + bo[...] + feat
    mu2 = jnp.mean(res, axis=-1, keepdims=True)
    var2 = jnp.mean(jnp.square(res - mu2), axis=-1, keepdims=True)
    feat2 = (res - mu2) * jax.lax.rsqrt(var2 + LN_EPS) * ln2_g[...] + ln2_b[...]

    # --- classifier (lane-padded to 128 for dense stores) ---
    # TODO(synk): nn.Dropout before the classifier is identity at inference.
    logits = jnp.dot(feat2.astype(jnp.bfloat16), wc[...],
                     preferred_element_type=jnp.float32) + bc[...]
    out_ref[...] = logits.reshape(Bk, S, l_pad)


def span_pool_attention_classifier(lstm_out, head_col, tail_col, mask_bias,
                                   dist_t, weights, num_heads, head_dim, l_pad,
                                   *, batch_block=2):
    B, T, D = lstm_out.shape
    S = head_col.shape[1]
    Bk = batch_block

    # Pad the batch to a multiple of Bk (padded rows produce finite garbage
    # that is sliced off below).
    B_pad = -(-B // Bk) * Bk
    if B_pad != B:
        p = B_pad - B
        lstm_out = jnp.pad(lstm_out, ((0, p), (0, 0), (0, 0)))
        head_col = jnp.pad(head_col, ((0, p), (0, 0), (0, 0)))
        tail_col = jnp.pad(tail_col, ((0, p), (0, 0), (0, 0)))
        mask_bias = jnp.pad(mask_bias, ((0, p), (0, 0), (0, 0)))
    n_blk = B_pad // Bk

    def full(w):
        nd = w.ndim
        return pl.BlockSpec(w.shape, lambda b, nd=nd: (0,) * nd)

    kernel = functools.partial(_span_head_kernel, num_heads=num_heads,
                               head_dim=head_dim, b_blk=Bk)
    out = pl.pallas_call(
        kernel,
        out_shape=jax.ShapeDtypeStruct((B_pad, S, l_pad), jnp.float32),
        grid=(n_blk,),
        in_specs=[
            pl.BlockSpec((Bk, T, D), lambda b: (b, 0, 0)),      # lstm features (bf16)
            pl.BlockSpec((Bk, S, 1), lambda b: (b, 0, 0)),      # span head idx
            pl.BlockSpec((Bk, S, 1), lambda b: (b, 0, 0)),      # span tail idx
            pl.BlockSpec((Bk, 1, S), lambda b: (b, 0, 0)),      # attn mask bias
            full(dist_t),
            full(weights[0]), full(weights[1]),                 # ln1 g/b
            full(weights[2]), full(weights[3]),                 # wq3 / bq3
            full(weights[4]), full(weights[5]),                 # wk3 / bk3
            full(weights[6]), full(weights[7]),                 # wv3 / bv3
            full(weights[8]), full(weights[9]),                 # wo3 / bo
            full(weights[10]), full(weights[11]),               # ln2 g/b
            full(weights[12]), full(weights[13]),               # wc / bc (padded)
        ],
        out_specs=pl.BlockSpec((Bk, S, l_pad), lambda b: (b, 0, 0)),
        scratch_shapes=[pltpu.VMEM((Bk, S, S), jnp.float32)],   # relative scores
        compiler_params=pltpu.CompilerParams(
            dimension_semantics=("parallel",),
            vmem_limit_bytes=_vmem_limit_bytes()),
    )(lstm_out, head_col, tail_col, mask_bias, dist_t, *weights)
    return out[:B]


# --------------------------------------------------------------------------
# Parameter init (deterministic, synthetic) + full forward glue.
# --------------------------------------------------------------------------
def init_params(key, vocab, T, D, H, head_dim, num_labels, max_pos):
    keys = iter(jax.random.split(key, 32))
    s = 0.02

    def nrm(shape, dtype=jnp.float32):
        return (s * jax.random.normal(next(keys), shape)).astype(dtype)

    bf = jnp.bfloat16
    p = {
        # stand-in encoder embeddings
        "word_emb": nrm((vocab, D)),
        "type_emb": nrm((2, D)),
        "pos_emb": nrm((T, D)),
        # BiLSTM (PyTorch gate order i,f,g,o; weights pre-transposed: x @ W).
        # b_* is the summed PyTorch (bias_ih + bias_hh).
        "wih_f": nrm((D, 4 * H), bf), "whh_f": nrm((H, 4 * H), bf), "b_f": nrm((1, 4 * H)),
        "wih_b": nrm((D, 4 * H), bf), "whh_b": nrm((H, 4 * H), bf), "b_b": nrm((1, 4 * H)),
        # LayerNorm over span features
        "ln1_g": jnp.ones((1, D), jnp.float32), "ln1_b": jnp.zeros((1, D), jnp.float32),
        # BertAttention (relative_key) + self-output
        "wq": nrm((D, D), bf), "bq": nrm((1, D)),
        "wk": nrm((D, D), bf), "bk": nrm((1, D)),
        "wv": nrm((D, D), bf), "bv": nrm((1, D)),
        "wo": nrm((D, D), bf), "bo": nrm((1, D)),
        "ln2_g": jnp.ones((1, D), jnp.float32), "ln2_b": jnp.zeros((1, D), jnp.float32),
        "dist_emb": nrm((2 * max_pos - 1, head_dim)),
        # classifier
        "wc": nrm((D, num_labels), bf), "bc": nrm((1, num_labels)),
    }
    return p


def feedback_model_forward(params, max_pos, num_heads, head_dim, num_labels,
                           input_ids, token_type_ids, attention_mask,
                           span_head_idxs, span_tail_idxs, span_attention_mask,
                           lstm_batch_block=8, span_batch_block=2):
    B, T = input_ids.shape
    D = params["word_emb"].shape[1]
    S = span_head_idxs.shape[1]

    # TODO(synk): the pretrained AutoModel backbone is replaced by a
    # deterministic embedding-sum stand-in (checkpoint weights cannot be loaded
    # in-script); attention_mask is accepted but unused by the stand-in.
    pos = jnp.arange(T)
    enc = (params["word_emb"][input_ids]
           + params["type_emb"][token_type_ids]
           + params["pos_emb"][pos][None, :, :]).astype(jnp.float32)

    # --- BiLSTM (Pallas kernel 1) -> bf16 (B, T, D) ---
    lstm_out = bilstm(enc, params["wih_f"], params["whh_f"], params["b_f"],
                      params["wih_b"], params["whh_b"], params["b_b"],
                      batch_block=lstm_batch_block)

    # --- glue tensors for the fused span kernel ---
    head_col = span_head_idxs.astype(jnp.int32).reshape(B, S, 1)
    tail_col = span_tail_idxs.astype(jnp.int32).reshape(B, S, 1)
    mask_bias = ((1.0 - span_attention_mask.astype(jnp.float32)) * -10000.0
                 ).reshape(B, 1, S)

    # relative_key distance band: only distances in [-(S-1), S-1] are used.
    # Reverse + lane-pad it so the kernel can do  q @ band^T  followed by a
    # strided roll instead of materializing the (S, S, head_dim) tensor.
    w_band = 2 * S - 1
    dist_slice = params["dist_emb"][max_pos - S: max_pos + S - 1]     # (2S-1, hd)
    dist_rev = dist_slice[::-1]
    w_pad = max(128, -(-w_band // 128) * 128)
    dist_rev_pad = jnp.zeros((w_pad, head_dim), jnp.float32).at[:w_band, :].set(dist_rev)
    dist_t = dist_rev_pad.T.astype(jnp.bfloat16)                      # (hd, w_pad)

    # lane-pad the classifier to 128 output lanes (dense stores)
    l_pad = max(128, -(-num_labels // 128) * 128)
    wc_pad = jnp.zeros((D, l_pad), params["wc"].dtype).at[:, :num_labels].set(params["wc"])
    bc_pad = jnp.zeros((1, l_pad), jnp.float32).at[:, :num_labels].set(params["bc"])

    # pre-split projection weights per head (lane-aligned head access in-kernel)
    def split_w(w):      # (D, D) -> (nh, D, hd), head h = columns [h*hd:(h+1)*hd]
        return w.reshape(D, num_heads, head_dim).transpose(1, 0, 2)

    def split_b(b):      # (1, D) -> (nh, 1, hd)
        return b.reshape(num_heads, 1, head_dim)

    wq3, wk3, wv3 = split_w(params["wq"]), split_w(params["wk"]), split_w(params["wv"])
    bq3, bk3, bv3 = split_b(params["bq"]), split_b(params["bk"]), split_b(params["bv"])
    wo3 = params["wo"].reshape(num_heads, head_dim, D)                # rows [h*hd:(h+1)*hd]

    weights = (params["ln1_g"], params["ln1_b"],
               wq3, bq3, wk3, bk3, wv3, bv3, wo3, params["bo"],
               params["ln2_g"], params["ln2_b"], wc_pad, bc_pad)

    # --- fused pool + LN + relative-key attention + LN + classifier (kernel 2) ---
    logits_pad = span_pool_attention_classifier(
        lstm_out, head_col, tail_col, mask_bias, dist_t, weights,
        num_heads, head_dim, l_pad, batch_block=span_batch_block)
    return logits_pad[:, :, :num_labels]


if __name__ == "__main__":
    B, T, D = 4, 16, 32
    H = D // 2
    num_heads, head_dim = 4, D // 4
    n_spans, num_labels = 4, 3
    vocab, max_pos = 100, 512

    key = jax.random.PRNGKey(0)
    k_ids, _ = jax.random.split(key)
    input_ids = jax.random.randint(k_ids, (B, T), 0, vocab)
    token_type_ids = jnp.zeros((B, T), dtype=jnp.int32)
    attention_mask = jnp.ones((B, T), dtype=jnp.float32)
    span_head_idxs = jnp.array([[0, 4, 8, 12],
                                [1, 5, 9, 12],
                                [0, 3, 7, 11],
                                [2, 6, 10, 13]], dtype=jnp.int32)
    span_tail_idxs = jnp.array([[4, 8, 12, 16],
                                [5, 9, 12, 16],
                                [3, 7, 11, 16],
                                [6, 10, 13, 16]], dtype=jnp.int32)
    span_attention_mask = jnp.ones((B, n_spans), dtype=jnp.float32)

    params = init_params(jax.random.PRNGKey(42), vocab, T, D, H,
                         head_dim, num_labels, max_pos)

    logits = feedback_model_forward(params, max_pos, num_heads, head_dim,
                                    num_labels, input_ids, token_type_ids,
                                    attention_mask, span_head_idxs,
                                    span_tail_idxs, span_attention_mask,
                                    lstm_batch_block=8, span_batch_block=2)
    jax.block_until_ready(logits)
    assert logits.shape == (B, n_spans, num_labels), logits.shape
    assert bool(jnp.all(jnp.isfinite(logits)))
    print("KERNEL_OK")
</pallas_src>

<mosaic_0001>
module attributes {stable_mosaic.version = 11 : i64} {
  func.func @_bilstm_kernel(%arg0: i32, %arg1: memref<1x128x32xbf16, #tpu.memory_space<vmem>>, %arg2: memref<32x64xbf16, #tpu.memory_space<vmem>>, %arg3: memref<16x64xbf16, #tpu.memory_space<vmem>>, %arg4: memref<1x64xf32, #tpu.memory_space<vmem>>, %arg5: memref<32x64xbf16, #tpu.memory_space<vmem>>, %arg6: memref<16x64xbf16, #tpu.memory_space<vmem>>, %arg7: memref<1x64xf32, #tpu.memory_space<vmem>>, %arg8: memref<1x128x32xbf16, #tpu.memory_space<vmem>>, %arg9: memref<128x64xbf16, #tpu.memory_space<vmem>>, %arg10: memref<128x64xbf16, #tpu.memory_space<vmem>>, %arg11: memref<8x16xf32, #tpu.memory_space<vmem>>, %arg12: memref<8x16xf32, #tpu.memory_space<vmem>>, %arg13: memref<8x16xf32, #tpu.memory_space<vmem>>, %arg14: memref<8x16xf32, #tpu.memory_space<vmem>>) attributes {dimension_semantics = [#tpu.dimension_semantics<parallel>], iteration_bounds = array<i64: 1>, scalar_prefetch = 0 : i64, scratch_operands = 6 : i64, tpu.core_type = #tpu.core_type<tc>, window_params = [{transform_indices = @transform_0, window_bounds = array<i64: 1, 128, 32>}, {pipeline_mode = #tpu.pipeline_mode<synchronous>, transform_indices = @transform_1, window_bounds = array<i64: 32, 64>}, {pipeline_mode = #tpu.pipeline_mode<synchronous>, transform_indices = @transform_2, window_bounds = array<i64: 16, 64>}, {pipeline_mode = #tpu.pipeline_mode<synchronous>, transform_indices = @transform_3, window_bounds = array<i64: 1, 64>}, {pipeline_mode = #tpu.pipeline_mode<synchronous>, transform_indices = @transform_4, window_bounds = array<i64: 32, 64>}, {pipeline_mode = #tpu.pipeline_mode<synchronous>, transform_indices = @transform_5, window_bounds = array<i64: 16, 64>}, {pipeline_mode = #tpu.pipeline_mode<synchronous>, transform_indices = @transform_6, window_bounds = array<i64: 1, 64>}, {transform_indices = @transform_7, window_bounds = array<i64: 1, 128, 32>}]} {
    %c0 = arith.constant 0 : index
    %c0_0 = arith.constant 0 : index
    %c0_1 = arith.constant 0 : index
    %0 = vector.load %arg1[%c0, %c0_0, %c0_1] : memref<1x128x32xbf16, #tpu.memory_space<vmem>>, vector<1x128x32xbf16>
    %1 = vector.shape_cast %0 : vector<1x128x32xbf16> to vector<128x32xbf16>
    %c0_2 = arith.constant 0 : index
    %c0_3 = arith.constant 0 : index
    %2 = vector.load %arg2[%c0_2, %c0_3] : memref<32x64xbf16, #tpu.memory_space<vmem>>, vector<32x64xbf16>
    %cst = arith.constant dense<0.000000e+00> : vector<128x64xf32>
    %3 = tpu.matmul %1, %2, %cst {dimension_numbers = #tpu.dot_dimension_numbers<[1], [0], [0], [1], [0, 0, 1, 1], [], []>} : vector<128x32xbf16>, vector<32x64xbf16>, vector<128x64xf32> -> vector<128x64xf32>
    %c0_4 = arith.constant 0 : index
    %c0_5 = arith.constant 0 : index
    %4 = vector.load %arg4[%c0_4, %c0_5] : memref<1x64xf32, #tpu.memory_space<vmem>>, vector<1x64xf32>
    %5 = vector.broadcast %4 : vector<1x64xf32> to vector<128x64xf32>
    %6 = arith.addf %3, %5 : vector<128x64xf32>
    %7 = arith.truncf %6 : vector<128x64xf32> to vector<128x64xbf16>
    %c0_6 = arith.constant 0 : index
    %c0_7 = arith.constant 0 : index
    %8 = vector.load %arg9[%c0_6, %c0_7] : memref<128x64xbf16, #tpu.memory_space<vmem>>, vector<128x64xbf16>
    tpu.vector_store %arg9[%c0_6, %c0_7], %7 {strides = array<i32>} : memref<128x64xbf16, #tpu.memory_space<vmem>>, vector<128x64xbf16>,
    %c0_8 = arith.constant 0 : index
    %c0_9 = arith.constant 0 : index
    %9 = vector.load %arg5[%c0_8, %c0_9] : memref<32x64xbf16, #tpu.memory_space<vmem>>, vector<32x64xbf16>
    %cst_10 = arith.constant dense<0.000000e+00> : vector<128x64xf32>
    %10 = tpu.matmul %1, %9, %cst_10 {dimension_numbers = #tpu.dot_dimension_numbers<[1], [0], [0], [1], [0, 0, 1, 1], [], []>} : vector<128x32xbf16>, vector<32x64xbf16>, vector<128x64xf32> -> vector<128x64xf32>
    %c0_11 = arith.constant 0 : index
    %c0_12 = arith.constant 0 : index
    %11 = vector.load %arg7[%c0_11, %c0_12] : memref<1x64xf32, #tpu.memory_space<vmem>>, vector<1x64xf32>
    %12 = vector.broadcast %11 : vector<1x64xf32> to vector<128x64xf32>
    %13 = arith.addf %10, %12 : vector<128x64xf32>
    %14 = arith.truncf %13 : vector<128x64xf32> to vector<128x64xbf16>
    %c0_13 = arith.constant 0 : index
    %c0_14 = arith.constant 0 : index
    %15 = vector.load %arg10[%c0_13, %c0_14] : memref<128x64xbf16, #tpu.memory_space<vmem>>, vector<128x64xbf16>
    tpu.vector_store %arg10[%c0_13, %c0_14], %14 {strides = array<i32>} : memref<128x64xbf16, #tpu.memory_space<vmem>>, vector<128x64xbf16>,
    %cst_15 = arith.constant 0.000000e+00 : f32
    %16 = vector.broadcast %cst_15 : f32 to vector<8x16xf32>
    %c0_16 = arith.constant 0 : index
    %c0_17 = arith.constant 0 : index
    %17 = vector.load %arg11[%c0_16, %c0_17] : memref<8x16xf32, #tpu.memory_space<vmem>>, vector<8x16xf32>
    tpu.vector_store %arg11[%c0_16, %c0_17], %16 {strides = array<i32>} : memref<8x16xf32, #tpu.memory_space<vmem>>, vector<8x16xf32>,
    %cst_18 = arith.constant 0.000000e+00 : f32
    %18 = vector.broadcast %cst_18 : f32 to vector<8x16xf32>
    %c0_19 = arith.constant 0 : index
    %c0_20 = arith.constant 0 : index
    %19 = vector.load %arg12[%c0_19, %c0_20] : memref<8x16xf32, #tpu.memory_space<vmem>>, vector<8x16xf32>
    tpu.vector_store %arg12[%c0_19, %c0_20], %18 {strides = array<i32>} : memref<8x16xf32, #tpu.memory_space<vmem>>, vector<8x16xf32>,
    %cst_21 = arith.constant 0.000000e+00 : f32
    %20 = vector.broadcast %cst_21 : f32 to vector<8x16xf32>
    %c0_22 = arith.constant 0 : index
    %c0_23 = arith.constant 0 : index
    %21 = vector.load %arg13[%c0_22, %c0_23] : memref<8x16xf32, #tpu.memory_space<vmem>>, vector<8x16xf32>
    tpu.vector_store %arg13[%c0_22, %c0_23], %20 {strides = array<i32>} : memref<8x16xf32, #tpu.memory_space<vmem>>, vector<8x16xf32>,
    %cst_24 = arith.constant 0.000000e+00 : f32
    %22 = vector.broadcast %cst_24 : f32 to vector<8x16xf32>
    %c0_25 = arith.constant 0 : index
    %c0_26 = arith.constant 0 : index
    %23 = vector.load %arg14[%c0_25, %c0_26] : memref<8x16xf32, #tpu.memory_space<vmem>>, vector<8x16xf32>
    tpu.vector_store %arg14[%c0_25, %c0_26], %22 {strides = array<i32>} : memref<8x16xf32, #tpu.memory_space<vmem>>, vector<8x16xf32>,
    %c0_i32 = arith.constant 0 : i32
    %c16_i32 = arith.constant 16 : i32
    %24 = arith.addi %c0_i32, %c16_i32 : i32
    %c1_i32 = arith.constant 1 : i32
    scf.for %arg15 = %c0_i32 to %24 step %c1_i32  : i32 {
      %c1_i32_28 = arith.constant 1 : i32
      %25 = arith.muli %arg15, %c1_i32_28 : i32
      %c0_i32_29 = arith.constant 0 : i32
      %26 = arith.addi %c0_i32_29, %25 : i32
      %c8_i32 = arith.constant 8 : i32
      %27 = arith.muli %26, %c8_i32 : i32
      %28 = tpu.assume_multiple %27, 8 : i32
      %c15_i32 = arith.constant 15 : i32
      %29 = arith.subi %c15_i32, %26 : i32
      %c8_i32_30 = arith.constant 8 : i32
      %30 = arith.muli %29, %c8_i32_30 : i32
      %31 = tpu.assume_multiple %30, 8 : i32
      %32 = arith.index_cast %28 : i32 to index
      %c0_31 = arith.constant 0 : index
      %33 = vector.load %arg9[%32, %c0_31] : memref<128x64xbf16, #tpu.memory_space<vmem>>, vector<8x64xbf16>
      %34 = arith.extf %33 : vector<8x64xbf16> to vector<8x64xf32>
      %c0_32 = arith.constant 0 : index
      %c0_33 = arith.constant 0 : index
      %35 = vector.load %arg11[%c0_32, %c0_33] : memref<8x16xf32, #tpu.memory_space<vmem>>, vector<8x16xf32>
      %36 = arith.truncf %35 : vector<8x16xf32> to vector<8x16xbf16>
      %c0_34 = arith.constant 0 : index
      %c0_35 = arith.constant 0 : index
      %37 = vector.load %arg3[%c0_34, %c0_35] : memref<16x64xbf16, #tpu.memory_space<vmem>>, vector<16x64xbf16>
      %cst_36 = arith.constant dense<0.000000e+00> : vector<8x64xf32>
      %38 = tpu.matmul %36, %37, %cst_36 {dimension_numbers = #tpu.dot_dimension_numbers<[1], [0], [0], [1], [0, 0, 1, 1], [], []>} : vector<8x16xbf16>, vector<16x64xbf16>, vector<8x64xf32> -> vector<8x64xf32>
      %39 = arith.addf %34, %38 : vector<8x64xf32>
      %c0_37 = arith.constant 0 : index
      %c0_38 = arith.constant 0 : index
      %40 = vector.load %arg12[%c0_37, %c0_38] : memref<8x16xf32, #tpu.memory_space<vmem>>, vector<8x16xf32>
      %41 = vector.extract_strided_slice %39 {offsets = [0, 0], sizes = [8, 16], strides = [1, 1]} : vector<8x64xf32> to vector<8x16xf32>
      %42 = arith.negf %41 : vector<8x16xf32>
      %43 = math.exp %42 : vector<8x16xf32>
      %cst_39 = arith.constant 1.000000e+00 : f32
      %44 = vector.broadcast %cst_39 : f32 to vector<8x16xf32>
      %45 = arith.addf %44, %43 : vector<8x16xf32>
      %46 = arith.divf %44, %45 : vector<8x16xf32>
      %47 = vector.extract_strided_slice %39 {offsets = [0, 16], sizes = [8, 16], strides = [1, 1]} : vector<8x64xf32> to vector<8x16xf32>
      %48 = arith.negf %47 : vector<8x16xf32>
      %49 = math.exp %48 : vector<8x16xf32>
      %cst_40 = arith.constant 1.000000e+00 : f32
      %50 = vector.broadcast %cst_40 : f32 to vector<8x16xf32>
      %51 = arith.addf %50, %49 : vector<8x16xf32>
      %52 = arith.divf %50, %51 : vector<8x16xf32>
      %53 = vector.extract_strided_slice %39 {offsets = [0, 32], sizes = [8, 16], strides = [1, 1]} : vector<8x64xf32> to vector<8x16xf32>
      %54 = math.tanh %53 : vector<8x16xf32>
      %55 = vector.extract_strided_slice %39 {offsets = [0, 48], sizes = [8, 16], strides = [1, 1]} : vector<8x64xf32> to vector<8x16xf32>
      %56 = arith.negf %55 : vector<8x16xf32>
      %57 = math.exp %56 : vector<8x16xf32>
      %cst_41 = arith.constant 1.000000e+00 : f32
      %58 = vector.broadcast %cst_41 : f32 to vector<8x16xf32>
      %59 = arith.addf %58, %57 : vector<8x16xf32>
      %60 = arith.divf %58, %59 : vector<8x16xf32>
      %61 = arith.mulf %52, %40 : vector<8x16xf32>
      %62 = arith.mulf %46, %54 : vector<8x16xf32>
      %63 = arith.addf %61, %62 : vector<8x16xf32>
      %64 = math.tanh %63 : vector<8x16xf32>
      %65 = arith.mulf %60, %64 : vector<8x16xf32>
      %c0_42 = arith.constant 0 : index
      %c0_43 = arith.constant 0 : index
      %66 = vector.load %arg11[%c0_42, %c0_43] : memref<8x16xf32, #tpu.memory_space<vmem>>, vector<8x16xf32>
      tpu.vector_store %arg11[%c0_42, %c0_43], %65 {strides = array<i32>} : memref<8x16xf32, #tpu.memory_space<vmem>>, vector<8x16xf32>,
      %c0_44 = arith.constant 0 : index
      %c0_45 = arith.constant 0 : index
      %67 = vector.load %arg12[%c0_44, %c0_45] : memref<8x16xf32, #tpu.memory_space<vmem>>, vector<8x16xf32>
      tpu.vector_store %arg12[%c0_44, %c0_45], %63 {strides = array<i32>} : memref<8x16xf32, #tpu.memory_space<vmem>>, vector<8x16xf32>,
      %68 = arith.truncf %65 : vector<8x16xf32> to vector<8x16xbf16>
      %c0_46 = arith.constant 0 : index
      %69 = arith.index_cast %28 : i32 to index
      %c0_47 = arith.constant 0 : index
      %70 = vector.load %arg8[%c0_46, %69, %c0_47] : memref<1x128x32xbf16, #tpu.memory_space<vmem>>, vector<1x8x16xbf16>
      %71 = vector.shape_cast %70 : vector<1x8x16xbf16> to vector<8x16xbf16>
      %72 = vector.shape_cast %68 : vector<8x16xbf16> to vector<1x8x16xbf16>
      tpu.vector_store %arg8[%c0_46, %69, %c0_47], %72 {strides = array<i32>} : memref<1x128x32xbf16, #tpu.memory_space<vmem>>, vector<1x8x16xbf16>,
      %73 = arith.index_cast %31 : i32 to index
      %c0_48 = arith.constant 0 : index
      %74 = vector.load %arg10[%73, %c0_48] : memref<128x64xbf16, #tpu.memory_space<vmem>>, vector<8x64xbf16>
      %75 = arith.extf %74 : vector<8x64xbf16> to vector<8x64xf32>
      %c0_49 = arith.constant 0 : index
      %c0_50 = arith.constant 0 : index
      %76 = vector.load %arg13[%c0_49, %c0_50] : memref<8x16xf32, #tpu.memory_space<vmem>>, vector<8x16xf32>
      %77 = arith.truncf %76 : vector<8x16xf32> to vector<8x16xbf16>
      %c0_51 = arith.constant 0 : index
      %c0_52 = arith.constant 0 : index
      %78 = vector.load %arg6[%c0_51, %c0_52] : memref<16x64xbf16, #tpu.memory_space<vmem>>, vector<16x64xbf16>
      %cst_53 = arith.constant dense<0.000000e+00> : vector<8x64xf32>
      %79 = tpu.matmul %77, %78, %cst_53 {dimension_numbers = #tpu.dot_dimension_numbers<[1], [0], [0], [1], [0, 0, 1, 1], [], []>} : vector<8x16xbf16>, vector<16x64xbf16>, vector<8x64xf32> -> vector<8x64xf32>
      %80 = arith.addf %75, %79 : vector<8x64xf32>
      %c0_54 = arith.constant 0 : index
      %c0_55 = arith.constant 0 : index
      %81 = vector.load %arg14[%c0_54, %c0_55] : memref<8x16xf32, #tpu.memory_space<vmem>>, vector<8x16xf32>
      %82 = vector.extract_strided_slice %80 {offsets = [0, 0], sizes = [8, 16], strides = [1, 1]} : vector<8x64xf32> to vector<8x16xf32>
      %83 = arith.negf %82 : vector<8x16xf32>
      %84 = math.exp %83 : vector<8x16xf32>
      %cst_56 = arith.constant 1.000000e+00 : f32
      %85 = vector.broadcast %cst_56 : f32 to vector<8x16xf32>
      %86 = arith.addf %85, %84 : vector<8x16xf32>
      %87 = arith.divf %85, %86 : vector<8x16xf32>
      %88 = vector.extract_strided_slice %80 {offsets = [0, 16], sizes = [8, 16], strides = [1, 1]} : vector<8x64xf32> to vector<8x16xf32>
      %89 = arith.negf %88 : vector<8x16xf32>
      %90 = math.exp %89 : vector<8x16xf32>
      %cst_57 = arith.constant 1.000000e+00 : f32
      %91 = vector.broadcast %cst_57 : f32 to vector<8x16xf32>
      %92 = arith.addf %91, %90 : vector<8x16xf32>
      %93 = arith.divf %91, %92 : vector<8x16xf32>
      %94 = vector.extract_strided_slice %80 {offsets = [0, 32], sizes = [8, 16], strides = [1, 1]} : vector<8x64xf32> to vector<8x16xf32>
      %95 = math.tanh %94 : vector<8x16xf32>
      %96 = vector.extract_strided_slice %80 {offsets = [0, 48], sizes = [8, 16], strides = [1, 1]} : vector<8x64xf32> to vector<8x16xf32>
      %97 = arith.negf %96 : vector<8x16xf32>
      %98 = math.exp %97 : vector<8x16xf32>
      %cst_58 = arith.constant 1.000000e+00 : f32
      %99 = vector.broadcast %cst_58 : f32 to vector<8x16xf32>
      %100 = arith.addf %99, %98 : vector<8x16xf32>
      %101 = arith.divf %99, %100 : vector<8x16xf32>
      %102 = arith.mulf %93, %81 : vector<8x16xf32>
      %103 = arith.mulf %87, %95 : vector<8x16xf32>
      %104 = arith.addf %102, %103 : vector<8x16xf32>
      %105 = math.tanh %104 : vector<8x16xf32>
      %106 = arith.mulf %101, %105 : vector<8x16xf32>
      %c0_59 = arith.constant 0 : index
      %c0_60 = arith.constant 0 : index
      %107 = vector.load %arg13[%c0_59, %c0_60] : memref<8x16xf32, #tpu.memory_space<vmem>>, vector<8x16xf32>
      tpu.vector_store %arg13[%c0_59, %c0_60], %106 {strides = array<i32>} : memref<8x16xf32, #tpu.memory_space<vmem>>, vector<8x16xf32>,
      %c0_61 = arith.constant 0 : index
      %c0_62 = arith.constant 0 : index
      %108 = vector.load %arg14[%c0_61, %c0_62] : memref<8x16xf32, #tpu.memory_space<vmem>>, vector<8x16xf32>
      tpu.vector_store %arg14[%c0_61, %c0_62], %104 {strides = array<i32>} : memref<8x16xf32, #tpu.memory_space<vmem>>, vector<8x16xf32>,
      %109 = arith.truncf %106 : vector<8x16xf32> to vector<8x16xbf16>
      %c0_63 = arith.constant 0 : index
      %110 = arith.index_cast %31 : i32 to index
      %c16 = arith.constant 16 : index
      %111 = vector.load %arg8[%c0_63, %110, %c16] : memref<1x128x32xbf16, #tpu.memory_space<vmem>>, vector<1x8x16xbf16>
      %112 = vector.shape_cast %111 : vector<1x8x16xbf16> to vector<8x16xbf16>
      %113 = vector.shape_cast %109 : vector<8x16xbf16> to vector<1x8x16xbf16>
      tpu.vector_store %arg8[%c0_63, %110, %c16], %113 {strides = array<i32>} : memref<1x128x32xbf16, #tpu.memory_space<vmem>>, vector<1x8x16xbf16>,
    }
    %c16_i32_27 = arith.constant 16 : i32
    return
  }
  func.func @transform_0(%arg0: i32) -> (i32, i32, i32) {
    %c0_i32 = arith.constant 0 : i32
    %c0_i32_0 = arith.constant 0 : i32
    %c0_i32_1 = arith.constant 0 : i32
    return %arg0, %c0_i32, %c0_i32_0 : i32, i32, i32
  }
  func.func @transform_1(%arg0: i32) -> (i32, i32) {
    %c0_i32 = arith.constant 0 : i32
    %c0_i32_0 = arith.constant 0 : i32
    %c0_i32_1 = arith.constant 0 : i32
    return %c0_i32, %c0_i32_0 : i32, i32
  }
  func.func @transform_2(%arg0: i32) -> (i32, i32) {
    %c0_i32 = arith.constant 0 : i32
    %c0_i32_0 = arith.constant 0 : i32
    %c0_i32_1 = arith.constant 0 : i32
    return %c0_i32, %c0_i32_0 : i32, i32
  }
  func.func @transform_3(%arg0: i32) -> (i32, i32) {
    %c0_i32 = arith.constant 0 : i32
    %c0_i32_0 = arith.constant 0 : i32
    %c0_i32_1 = arith.constant 0 : i32
    return %c0_i32, %c0_i32_0 : i32, i32
  }
  func.func @transform_4(%arg0: i32) -> (i32, i32) {
    %c0_i32 = arith.constant 0 : i32
    %c0_i32_0 = arith.constant 0 : i32
    %c0_i32_1 = arith.constant 0 : i32
    return %c0_i32, %c0_i32_0 : i32, i32
  }
  func.func @transform_5(%arg0: i32) -> (i32, i32) {
    %c0_i32 = arith.constant 0 : i32
    %c0_i32_0 = arith.constant 0 : i32
    %c0_i32_1 = arith.constant 0 : i32
    return %c0_i32, %c0_i32_0 : i32, i32
  }
  func.func @transform_6(%arg0: i32) -> (i32, i32) {
    %c0_i32 = arith.constant 0 : i32
    %c0_i32_0 = arith.constant 0 : i32
    %c0_i32_1 = arith.constant 0 : i32
    return %c0_i32, %c0_i32_0 : i32, i32
  }
  func.func @transform_7(%arg0: i32) -> (i32, i32, i32) {
    %c0_i32 = arith.constant 0 : i32
    %c0_i32_0 = arith.constant 0 : i32
    %c0_i32_1 = arith.constant 0 : i32
    return %arg0, %c0_i32, %c0_i32_0 : i32, i32, i32
  }
}

</mosaic_0001>

<llo_original>
// kernel: tpu_custom_call.1
$region0: #{tpu_custom_call.1}
  #allocation0 [shape = 'u32[]', space=smem, size = 0x4, offset = 0x4, fixed_abs, tag = 'smem constant byte address 0x4 - core index']
  #allocation1 [shape = 'u32[144,128]{1,0:T(1,128)}', space=vmem, size = 0x12000, scoped, tag = 'internal scratch']
  #allocation2 [shape = 'bf16[128,64]{1,0:T(8,128)(2,1)}', space=vmem, size = 0x8000, scoped, tag = 'scratch operand']
  #allocation3 [shape = 'bf16[128,64]{1,0:T(8,128)(2,1)}', space=vmem, size = 0x8000, scoped, tag = 'scratch operand']
  #allocation4 [shape = 'f32[8,16]{1,0:T(8,128)}', space=vmem, size = 0x1000, scoped, tag = 'scratch operand']
  #allocation5 [shape = 'f32[8,16]{1,0:T(8,128)}', space=vmem, size = 0x1000, scoped, tag = 'scratch operand']
  #allocation6 [shape = 'f32[8,16]{1,0:T(8,128)}', space=vmem, size = 0x1000, scoped, tag = 'scratch operand']
  #allocation7 [shape = 'f32[8,16]{1,0:T(8,128)}', space=vmem, size = 0x1000, scoped, tag = 'scratch operand']
  %s0 = inlined_call_operand.vmem [shape: bf16[1,128,32], index: 0, kind: input, shape index: {}]
  %s1 = inlined_call_operand.vmem [shape: bf16[32,64], index: 1, kind: input, shape index: {}]
  %s2 = inlined_call_operand.vmem [shape: bf16[16,64], index: 2, kind: input, shape index: {}]
  %s3 = inlined_call_operand.vmem [shape: f32[1,64], index: 3, kind: input, shape index: {}]
  %s4 = inlined_call_operand.vmem [shape: bf16[32,64], index: 4, kind: input, shape index: {}]
  %s5 = inlined_call_operand.vmem [shape: bf16[16,64], index: 5, kind: input, shape index: {}]
  %s6 = inlined_call_operand.vmem [shape: f32[1,64], index: 6, kind: input, shape index: {}]
  %s7 = inlined_call_operand.vmem [shape: bf16[1,128,32], index: 7, kind: output, shape index: {}]
  %s8 = sld [smem:[#allocation0]]
  $region45: #{tpu_custom_call.1} parent=0
    _
  %s10 = ssub.s32 1, %s8
  %s11 = scalar_select 0, %s10, %s8
  // Predicated region
  $region2: #{tpu_custom_call.1} parent=0 // pred_check
    _
  $region3: #{tpu_custom_call.1} parent=0 // pred_check_branch
    %13 = sbr.rel (0) target = $region5
  $region4: #{tpu_custom_call.1} parent=0 // pred_region
    _
  $region5: #{tpu_custom_call.1} parent=0 // pred_fallthru
    _
  // Predicated region
  $region6: #{tpu_custom_call.1} parent=0 // pred_check
    _
  $region7: #{tpu_custom_call.1} parent=0 // pred_check_branch
    %15 = sbr.rel (0) target = $region9
  $region8: #{tpu_custom_call.1} parent=0 // pred_region
    _
  $region9: #{tpu_custom_call.1} parent=0 // pred_fallthru
    _
  // Predicated region
  $region10: #{tpu_custom_call.1} parent=0 // pred_check
    _
  $region11: #{tpu_custom_call.1} parent=0 // pred_check_branch
    %17 = sbr.rel (0) target = $region13
  $region12: #{tpu_custom_call.1} parent=0 // pred_region
    _
  $region13: #{tpu_custom_call.1} parent=0 // pred_fallthru
    _
  // Predicated region
  $region14: #{tpu_custom_call.1} parent=0 // pred_check
    _
  $region15: #{tpu_custom_call.1} parent=0 // pred_check_branch
    %19 = sbr.rel (0) target = $region17
  $region16: #{tpu_custom_call.1} parent=0 // pred_region
    _
  $region17: #{tpu_custom_call.1} parent=0 // pred_fallthru
    _
  // Predicated region
  $region18: #{tpu_custom_call.1} parent=0 // pred_check
    _
  $region19: #{tpu_custom_call.1} parent=0 // pred_check_branch
    %21 = sbr.rel (0) target = $region21
  $region20: #{tpu_custom_call.1} parent=0 // pred_region
    _
  $region21: #{tpu_custom_call.1} parent=0 // pred_fallthru
    _
  // Predicated region
  $region22: #{tpu_custom_call.1} parent=0 // pred_check
    _
  $region23: #{tpu_custom_call.1} parent=0 // pred_check_branch
    %23 = sbr.rel (0) target = $region25
  $region24: #{tpu_custom_call.1} parent=0 // pred_region
    _
  $region25: #{tpu_custom_call.1} parent=0 // pred_fallthru
    _
  // Predicated region
  $region26: #{tpu_custom_call.1} parent=0 // pred_check
    _
  $region27: #{tpu_custom_call.1} parent=0 // pred_check_branch
    %25 = sbr.rel (0) target = $region29
  $region28: #{tpu_custom_call.1} parent=0 // pred_region
    _
  $region29: #{tpu_custom_call.1} parent=0 // pred_fallthru
    _
  %v27 = vld [vmem:[%s0] sm:$0xf]
  %v28 = vld [vmem:[%s0 + $0x4] sm:$0xf]
  %v29 = vld [vmem:[%s0 + $0x8] sm:$0xf]
  %v30 = vld [vmem:[%s0 + $0xc] sm:$0xf]
  %v31 = vld [vmem:[%s0 + $0x10] sm:$0xf]
  %v32 = vld [vmem:[%s0 + $0x14] sm:$0xf]
  %v33 = vld [vmem:[%s0 + $0x18] sm:$0xf]
  %v34 = vld [vmem:[%s0 + $0x1c] sm:$0xf]
  %v35 = vld [vmem:[%s0 + $0x20] sm:$0xf]
  %v36 = vld [vmem:[%s0 + $0x24] sm:$0xf]
  %v37 = vld [vmem:[%s0 + $0x28] sm:$0xf]
  %v38 = vld [vmem:[%s0 + $0x2c] sm:$0xf]
  %v39 = vld [vmem:[%s0 + $0x30] sm:$0xf]
  %v40 = vld [vmem:[%s0 + $0x34] sm:$0xf]
  %v41 = vld [vmem:[%s0 + $0x38] sm:$0xf]
  %v42 = vld [vmem:[%s0 + $0x3c] sm:$0xf]
  %v43 = vld [vmem:[%s1] sm:$0xf]
  %v44 = vld [vmem:[%s1 + $0x4] sm:$0xf]
  %v45 = vld [vmem:[%s1 + $0x8] sm:$0xf]
  %v46 = vld [vmem:[%s1 + $0xc] sm:$0xf]
  %v47 = vld [vmem:[%s3] sm:$0x1]
  %v49 = vlaneseq
  %v50 = vshrl.u32 %v49, 7
  %v51 = vsub.s32 0, %v50
  %v52 = vrot.slane %v47, %v51
  %v70 = vunpack.c.l.b16 %v27
  %v71 = vunpack.c.l.b16 %v28
  %v72 = vunpack.c.l.b16 %v29
  %v73 = vunpack.c.l.b16 %v30
  %v74 = vunpack.c.l.b16 %v31
  %v75 = vunpack.c.l.b16 %v32
  %v76 = vunpack.c.l.b16 %v33
  %v77 = vunpack.c.l.b16 %v34
  %v78 = vunpack.c.l.b16 %v35
  %v79 = vunpack.c.l.b16 %v36
  %v80 = vunpack.c.l.b16 %v37
  %v81 = vunpack.c.l.b16 %v38
  %v82 = vunpack.c.l.b16 %v39
  %v83 = vunpack.c.l.b16 %v40
  %v84 = vunpack.c.l.b16 %v41
  %v85 = vunpack.c.l.b16 %v42
  %v86 = vpack.c.b16 %v71, %v70
  %v87 = vpack.c.b16 %v73, %v72
  %v88 = vpack.c.b16 %v75, %v74
  %v89 = vpack.c.b16 %v77, %v76
  %v90 = vpack.c.b16 %v79, %v78
  %v91 = vpack.c.b16 %v81, %v80
  %v92 = vpack.c.b16 %v83, %v82
  %v93 = vpack.c.b16 %v85, %v84
  %v98 = vunpack.c.l.b16 %v43
  %v99 = vunpack.c.l.b16 %v44
  %v100 = vunpack.c.l.b16 %v45
  %v101 = vunpack.c.l.b16 %v46
  %v102 = vpack.c.b16 %v99, %v98
  %v103 = vpack.c.b16 %v101, %v100
  %vm106 = vcmask 261120
  %v108 = vsel %vm106, %v86, 0
  %v111 = vsel %vm106, %v87, 0
  %v114 = vsel %vm106, %v88, 0
  %v117 = vsel %vm106, %v89, 0
  %v120 = vsel %vm106, %v90, 0
  %v123 = vsel %vm106, %v91, 0
  %v126 = vsel %vm106, %v92, 0
  %v129 = vsel %vm106, %v93, 0
  %131 = vmatprep.subr.bf16.mxu0 0
  %132 = vmatpush1.bf16.msra.mxu0 0
  %133 = vmatprep.subr.bf16.mxu0 0
  %134 = vmatpush1.bf16.msra.mxu0 0
  %135 = vmatprep.subr.bf16.mxu0 0
  %136 = vmatpush1.bf16.msra.mxu0 0
  %137 = vmatprep.subr.bf16.mxu0 0
  %138 = vmatpush1.bf16.msra.mxu0 0
  %139 = vmatprep.subr.bf16.mxu0 0
  %140 = vmatpush1.bf16.msra.mxu0 0
  %141 = vmatprep.subr.bf16.mxu0 0
  %142 = vmatpush1.bf16.msra.mxu0 0
  %143 = vmatprep.subr.bf16.mxu0 0
  %144 = vmatpush1.bf16.msra.mxu0 %v103
  %145 = vmatprep.subr.bf16.mxu0 0
  %146 = vmatpush1.bf16.msra.mxu0 %v102
  %147 = vmatprep.subr.bf16.mxu0 0
  %148 = vmatpush2.bf16.msra.mxu0 0
  %149 = vmatprep.subr.bf16.mxu0 0
  %150 = vmatpush2.bf16.msra.mxu0 0
  %151 = vmatprep.subr.bf16.mxu0 0
  %152 = vmatpush2.bf16.msra.mxu0 0
  %153 = vmatprep.subr.bf16.mxu0 0
  %154 = vmatpush2.bf16.msra.mxu0 0
  %155 = vmatprep.subr.bf16.mxu0 0
  %156 = vmatpush2.bf16.msra.mxu0 0
  %157 = vmatprep.subr.bf16.mxu0 0
  %158 = vmatpush2.bf16.msra.mxu0 0
  %159 = vmatprep.subr.bf16.mxu0 0
  %160 = vmatpush2.bf16.msra.mxu0 0
  %161 = vmatprep.subr.bf16.mxu0 0
  %162 = vmatpush2.bf16.msra.mxu0 0
  %163 = vmatprep.mubr.bf16.mxu0 0
  %164 = vmatmul.mubr.bf16.gmra.mxu0 %v108
  %v165 = vpop.f32.mrf.mxu0
  %v166 = vadd.f32 %v52, %v165
  %v167 = vpop.f32.mrf.mxu0
  %v168 = vpop.f32.mrf.mxu0
  %v169 = vadd.f32 %v52, %v168
  %v170 = vpop.f32.mrf.mxu0
  %171 = vmatprep.mubr.bf16.mxu0 0
  %172 = vmatmul.mubr.bf16.gmra.mxu0 %v111
  %v173 = vpop.f32.mrf.mxu0
  %v174 = vadd.f32 %v52, %v173
  %v175 = vpop.f32.mrf.mxu0
  %v176 = vpop.f32.mrf.mxu0
  %v177 = vadd.f32 %v52, %v176
  %v178 = vpop.f32.mrf.mxu0
  %179 = vmatprep.mubr.bf16.mxu0 0
  %180 = vmatmul.mubr.bf16.gmra.mxu0 %v114
  %v181 = vpop.f32.mrf.mxu0
  %v182 = vadd.f32 %v52, %v181
  %v183 = vpop.f32.mrf.mxu0
  %v184 = vpop.f32.mrf.mxu0
  %v185 = vadd.f32 %v52, %v184
  %v186 = vpop.f32.mrf.mxu0
  %187 = vmatprep.mubr.bf16.mxu0 0
  %188 = vmatmul.mubr.bf16.gmra.mxu0 %v117
  %v189 = vpop.f32.mrf.mxu0
  %v190 = vadd.f32 %v52, %v189
  %v191 = vpop.f32.mrf.mxu0
  %v192 = vpop.f32.mrf.mxu0
  %v193 = vadd.f32 %v52, %v192
  %v194 = vpop.f32.mrf.mxu0
  %195 = vmatprep.mubr.bf16.mxu0 0
  %196 = vmatmul.mubr.bf16.gmra.mxu0 %v120
  %v197 = vpop.f32.mrf.mxu0
  %v198 = vadd.f32 %v52, %v197
  %v199 = vpop.f32.mrf.mxu0
  %v200 = vpop.f32.mrf.mxu0
  %v201 = vadd.f32 %v52, %v200
  %v202 = vpop.f32.mrf.mxu0
  %203 = vmatprep.mubr.bf16.mxu0 0
  %204 = vmatmul.mubr.bf16.gmra.mxu0 %v123
  %v205 = vpop.f32.mrf.mxu0
  %v206 = vadd.f32 %v52, %v205
  %v207 = vpop.f32.mrf.mxu0
  %v208 = vpop.f32.mrf.mxu0
  %v209 = vadd.f32 %v52, %v208
  %v210 = vpop.f32.mrf.mxu0
  %211 = vmatprep.mubr.bf16.mxu0 0
  %212 = vmatmul.mubr.bf16.gmra.mxu0 %v126
  %v213 = vpop.f32.mrf.mxu0
  %v214 = vadd.f32 %v52, %v213
  %v215 = vpop.f32.mrf.mxu0
  %v216 = vpop.f32.mrf.mxu0
  %v217 = vadd.f32 %v52, %v216
  %v218 = vpop.f32.mrf.mxu0
  %219 = vmatprep.mubr.bf16.mxu0 0
  %220 = vmatmul.mubr.bf16.gmra.mxu0 %v129
  %v221 = vpop.f32.mrf.mxu0
  %v222 = vadd.f32 %v52, %v221
  %v223 = vpop.f32.mrf.mxu0
  %v224 = vpop.f32.mrf.mxu0
  %v225 = vadd.f32 %v52, %v224
  %v226 = vpop.f32.mrf.mxu0
  %227 = vdwg.mxu0
  %v228 = vpack.c.bf16 %v169, %v166
  %v229 = vpack.c.bf16 %v177, %v174
  %v230 = vpack.c.bf16 %v185, %v182
  %v231 = vpack.c.bf16 %v193, %v190
  %v232 = vpack.c.bf16 %v201, %v198
  %v233 = vpack.c.bf16 %v209, %v206
  %v234 = vpack.c.bf16 %v217, %v214
  %v235 = vpack.c.bf16 %v225, %v222
  %v244 = vunpack.c.l.b16 %v228
  %v245 = vunpack.c.h.b16 %v228
  %v246 = vunpack.c.l.b16 %v229
  %v247 = vunpack.c.h.b16 %v229
  %v248 = vunpack.c.l.b16 %v230
  %v249 = vunpack.c.h.b16 %v230
  %v250 = vunpack.c.l.b16 %v231
  %v251 = vunpack.c.h.b16 %v231
  %v252 = vunpack.c.l.b16 %v232
  %v253 = vunpack.c.h.b16 %v232
  %v254 = vunpack.c.l.b16 %v233
  %v255 = vunpack.c.h.b16 %v233
  %v256 = vunpack.c.l.b16 %v234
  %v257 = vunpack.c.h.b16 %v234
  %v258 = vunpack.c.l.b16 %v235
  %v259 = vunpack.c.h.b16 %v235
  %v260 = vpack.c.b16 %v244, %v244
  %v261 = vpack.c.b16 %v245, %v245
  %v262 = vpack.c.b16 %v246, %v246
  %v263 = vpack.c.b16 %v247, %v247
  %v264 = vpack.c.b16 %v248, %v248
  %v265 = vpack.c.b16 %v249, %v249
  %v266 = vpack.c.b16 %v250, %v250
  %v267 = vpack.c.b16 %v251, %v251
  %v268 = vpack.c.b16 %v252, %v252
  %v269 = vpack.c.b16 %v253, %v253
  %v270 = vpack.c.b16 %v254, %v254
  %v271 = vpack.c.b16 %v255, %v255
  %v272 = vpack.c.b16 %v256, %v256
  %v273 = vpack.c.b16 %v257, %v257
  %v274 = vpack.c.b16 %v258, %v258
  %v275 = vpack.c.b16 %v259, %v259
  %vm292 = vcmask 519168
  %293 = vst.msk [vmem:[#allocation2] sm:$0xf] %vm292, %v260
  %294 = vst.msk [vmem:[#allocation2 + $0x4] sm:$0xf] %vm292, %v261
  %295 = vst.msk [vmem:[#allocation2 + $0x8] sm:$0xf] %vm292, %v262
  %296 = vst.msk [vmem:[#allocation2 + $0xc] sm:$0xf] %vm292, %v263
  %297 = vst.msk [vmem:[#allocation2 + $0x10] sm:$0xf] %vm292, %v264
  %298 = vst.msk [vmem:[#allocation2 + $0x14] sm:$0xf] %vm292, %v265
  %299 = vst.msk [vmem:[#allocation2 + $0x18] sm:$0xf] %vm292, %v266
  %300 = vst.msk [vmem:[#allocation2 + $0x1c] sm:$0xf] %vm292, %v267
  %301 = vst.msk [vmem:[#allocation2 + $0x20] sm:$0xf] %vm292, %v268
  %302 = vst.msk [vmem:[#allocation2 + $0x24] sm:$0xf] %vm292, %v269
  %303 = vst.msk [vmem:[#allocation2 + $0x28] sm:$0xf] %vm292, %v270
  %304 = vst.msk [vmem:[#allocation2 + $0x2c] sm:$0xf] %vm292, %v271
  %305 = vst.msk [vmem:[#allocation2 + $0x30] sm:$0xf] %vm292, %v272
  %306 = vst.msk [vmem:[#allocation2 + $0x34] sm:$0xf] %vm292, %v273
  %307 = vst.msk [vmem:[#allocation2 + $0x38] sm:$0xf] %vm292, %v274
  %308 = vst.msk [vmem:[#allocation2 + $0x3c] sm:$0xf] %vm292, %v275
  %v309 = vld [vmem:[%s4] sm:$0xf]
  %v310 = vld [vmem:[%s4 + $0x4] sm:$0xf]
  %v311 = vld [vmem:[%s4 + $0x8] sm:$0xf]
  %v312 = vld [vmem:[%s4 + $0xc] sm:$0xf]
  %v313 = vld [vmem:[%s6] sm:$0x1]
  %v315 = vlaneseq
  %v316 = vshrl.u32 %v315, 7
  %v317 = vsub.s32 0, %v316
  %v318 = vrot.slane %v313, %v317
  %v324 = vunpack.c.l.b16 %v309
  %v325 = vunpack.c.l.b16 %v310
  %v326 = vunpack.c.l.b16 %v311
  %v327 = vunpack.c.l.b16 %v312
  %v328 = vpack.c.b16 %v325, %v324
  %v329 = vpack.c.b16 %v327, %v326
  %332 = vmatprep.subr.bf16.mxu0 0
  %333 = vmatpush1.bf16.msra.mxu0 0
  %334 = vmatprep.subr.bf16.mxu0 0
  %335 = vmatpush1.bf16.msra.mxu0 0
  %336 = vmatprep.subr.bf16.mxu0 0
  %337 = vmatpush1.bf16.msra.mxu0 0
  %338 = vmatprep.subr.bf16.mxu0 0
  %339 = vmatpush1.bf16.msra.mxu0 0
  %340 = vmatprep.subr.bf16.mxu0 0
  %341 = vmatpush1.bf16.msra.mxu0 0
  %342 = vmatprep.subr.bf16.mxu0 0
  %343 = vmatpush1.bf16.msra.mxu0 0
  %344 = vmatprep.subr.bf16.mxu0 0
  %345 = vmatpush1.bf16.msra.mxu0 %v329
  %346 = vmatprep.subr.bf16.mxu0 0
  %347 = vmatpush1.bf16.msra.mxu0 %v328
  %348 = vmatprep.subr.bf16.mxu0 0
  %349 = vmatpush2.bf16.msra.mxu0 0
  %350 = vmatprep.subr.bf16.mxu0 0
  %351 = vmatpush2.bf16.msra.mxu0 0
  %352 = vmatprep.subr.bf16.mxu0 0
  %353 = vmatpush2.bf16.msra.mxu0 0
  %354 = vmatprep.subr.bf16.mxu0 0
  %355 = vmatpush2.bf16.msra.mxu0 0
  %356 = vmatprep.subr.bf16.mxu0 0
  %357 = vmatpush2.bf16.msra.mxu0 0
  %358 = vmatprep.subr.bf16.mxu0 0
  %359 = vmatpush2.bf16.msra.mxu0 0
  %360 = vmatprep.subr.bf16.mxu0 0
  %361 = vmatpush2.bf16.msra.mxu0 0
  %362 = vmatprep.subr.bf16.mxu0 0
  %363 = vmatpush2.bf16.msra.mxu0 0
  %364 = vmatprep.mubr.bf16.mxu0 0
  %365 = vmatmul.mubr.bf16.gmra.mxu0 %v108
  %v366 = vpop.f32.mrf.mxu0
  %v367 = vadd.f32 %v318, %v366
  %v368 = vpop.f32.mrf.mxu0
  %v369 = vpop.f32.mrf.mxu0
  %v370 = vadd.f32 %v318, %v369
  %v371 = vpop.f32.mrf.mxu0
  %372 = vmatprep.mubr.bf16.mxu0 0
  %373 = vmatmul.mubr.bf16.gmra.mxu0 %v111
  %v374 = vpop.f32.mrf.mxu0
  %v375 = vadd.f32 %v318, %v374
  %v376 = vpop.f32.mrf.mxu0
  %v377 = vpop.f32.mrf.mxu0
  %v378 = vadd.f32 %v318, %v377
  %v379 = vpop.f32.mrf.mxu0
  %380 = vmatprep.mubr.bf16.mxu0 0
  %381 = vmatmul.mubr.bf16.gmra.mxu0 %v114
  %v382 = vpop.f32.mrf.mxu0
  %v383 = vadd.f32 %v318, %v382
  %v384 = vpop.f32.mrf.mxu0
  %v385 = vpop.f32.mrf.mxu0
  %v386 = vadd.f32 %v318, %v385
  %v387 = vpop.f32.mrf.mxu0
  %388 = vmatprep.mubr.bf16.mxu0 0
  %389 = vmatmul.mubr.bf16.gmra.mxu0 %v117
  %v390 = vpop.f32.mrf.mxu0
  %v391 = vadd.f32 %v318, %v390
  %v392 = vpop.f32.mrf.mxu0
  %v393 = vpop.f32.mrf.mxu0
  %v394 = vadd.f32 %v318, %v393
  %v395 = vpop.f32.mrf.mxu0
  %396 = vmatprep.mubr.bf16.mxu0 0
  %397 = vmatmul.mubr.bf16.gmra.mxu0 %v120
  %v398 = vpop.f32.mrf.mxu0
  %v399 = vadd.f32 %v318, %v398
  %v400 = vpop.f32.mrf.mxu0
  %v401 = vpop.f32.mrf.mxu0
  %v402 = vadd.f32 %v318, %v401
  %v403 = vpop.f32.mrf.mxu0
  %404 = vmatprep.mubr.bf16.mxu0 0
  %405 = vmatmul.mubr.bf16.gmra.mxu0 %v123
  %v406 = vpop.f32.mrf.mxu0
  %v407 = vadd.f32 %v318, %v406
  %v408 = vpop.f32.mrf.mxu0
  %v409 = vpop.f32.mrf.mxu0
  %v410 = vadd.f32 %v318, %v409
  %v411 = vpop.f32.mrf.mxu0
  %412 = vmatprep.mubr.bf16.mxu0 0
  %413 = vmatmul.mubr.bf16.gmra.mxu0 %v126
  %v414 = vpop.f32.mrf.mxu0
  %v415 = vadd.f32 %v318, %v414
  %v416 = vpop.f32.mrf.mxu0
  %v417 = vpop.f32.mrf.mxu0
  %v418 = vadd.f32 %v318, %v417
  %v419 = vpop.f32.mrf.mxu0
  %420 = vmatprep.mubr.bf16.mxu0 0
  %421 = vmatmul.mubr.bf16.gmra.mxu0 %v129
  %v422 = vpop.f32.mrf.mxu0
  %v423 = vadd.f32 %v318, %v422
  %v424 = vpop.f32.mrf.mxu0
  %v425 = vpop.f32.mrf.mxu0
  %v426 = vadd.f32 %v318, %v425
  %v427 = vpop.f32.mrf.mxu0
  %428 = vdwg.mxu0
  %v429 = vpack.c.bf16 %v370, %v367
  %v430 = vpack.c.bf16 %v378, %v375
  %v431 = vpack.c.bf16 %v386, %v383
  %v432 = vpack.c.bf16 %v394, %v391
  %v433 = vpack.c.bf16 %v402, %v399
  %v434 = vpack.c.bf16 %v410, %v407
  %v435 = vpack.c.bf16 %v418, %v415
  %v436 = vpack.c.bf16 %v426, %v423
  %v445 = vunpack.c.l.b16 %v429
  %v446 = vunpack.c.h.b16 %v429
  %v447 = vunpack.c.l.b16 %v430
  %v448 = vunpack.c.h.b16 %v430
  %v449 = vunpack.c.l.b16 %v431
  %v450 = vunpack.c.h.b16 %v431
  %v451 = vunpack.c.l.b16 %v432
  %v452 = vunpack.c.h.b16 %v432
  %v453 = vunpack.c.l.b16 %v433
  %v454 = vunpack.c.h.b16 %v433
  %v455 = vunpack.c.l.b16 %v434
  %v456 = vunpack.c.h.b16 %v434
  %v457 = vunpack.c.l.b16 %v435
  %v458 = vunpack.c.h.b16 %v435
  %v459 = vunpack.c.l.b16 %v436
  %v460 = vunpack.c.h.b16 %v436
  %v461 = vpack.c.b16 %v445, %v445
  %v462 = vpack.c.b16 %v446, %v446
  %v463 = vpack.c.b16 %v447, %v447
  %v464 = vpack.c.b16 %v448, %v448
  %v465 = vpack.c.b16 %v449, %v449
  %v466 = vpack.c.b16 %v450, %v450
  %v467 = vpack.c.b16 %v451, %v451
  %v468 = vpack.c.b16 %v452, %v452
  %v469 = vpack.c.b16 %v453, %v453
  %v470 = vpack.c.b16 %v454, %v454
  %v471 = vpack.c.b16 %v455, %v455
  %v472 = vpack.c.b16 %v456, %v456
  %v473 = vpack.c.b16 %v457, %v457
  %v474 = vpack.c.b16 %v458, %v458
  %v475 = vpack.c.b16 %v459, %v459
  %v476 = vpack.c.b16 %v460, %v460
  %493 = vst.msk [vmem:[#allocation3] sm:$0xf] %vm292, %v461
  %494 = vst.msk [vmem:[#allocation3 + $0x4] sm:$0xf] %vm292, %v462
  %495 = vst.msk [vmem:[#allocation3 + $0x8] sm:$0xf] %vm292, %v463
  %496 = vst.msk [vmem:[#allocation3 + $0xc] sm:$0xf] %vm292, %v464
  %497 = vst.msk [vmem:[#allocation3 + $0x10] sm:$0xf] %vm292, %v465
  %498 = vst.msk [vmem:[#allocation3 + $0x14] sm:$0xf] %vm292, %v466
  %499 = vst.msk [vmem:[#allocation3 + $0x18] sm:$0xf] %vm292, %v467
  %500 = vst.msk [vmem:[#allocation3 + $0x1c] sm:$0xf] %vm292, %v468
  %501 = vst.msk [vmem:[#allocation3 + $0x20] sm:$0xf] %vm292, %v469
  %502 = vst.msk [vmem:[#allocation3 + $0x24] sm:$0xf] %vm292, %v470
  %503 = vst.msk [vmem:[#allocation3 + $0x28] sm:$0xf] %vm292, %v471
  %504 = vst.msk [vmem:[#allocation3 + $0x2c] sm:$0xf] %vm292, %v472
  %505 = vst.msk [vmem:[#allocation3 + $0x30] sm:$0xf] %vm292, %v473
  %506 = vst.msk [vmem:[#allocation3 + $0x34] sm:$0xf] %vm292, %v474
  %507 = vst.msk [vmem:[#allocation3 + $0x38] sm:$0xf] %vm292, %v475
  %508 = vst.msk [vmem:[#allocation3 + $0x3c] sm:$0xf] %vm292, %v476
  %vm509 = vcmask 130048
  %510 = vst.msk [vmem:[#allocation4] sm:$0xff] %vm509, 0.0
  %511 = vst.msk [vmem:[#allocation5] sm:$0xff] %vm509, 0.0
  %512 = vst.msk [vmem:[#allocation6] sm:$0xff] %vm509, 0.0
  %513 = vst.msk [vmem:[#allocation7] sm:$0xff] %vm509, 0.0
  loop: start=0, step=1, limit=16
  $region30: #{tpu_custom_call.1} parent=0 // loop_pre_header
    _
  $region31: #{tpu_custom_call.1} parent=0 // loop_header
    %s515 = sphi 0, %s519
    %p516 = scmp.ge.s32.totalorder %s515, 16
  $region32: #{tpu_custom_call.1} parent=0 // loop_header_branch
    %518 = sbr.rel (%p516) target = $region36
  $region33: #{tpu_custom_call.1} parent=0 // loop_body
    %s520 = smul.u32 %s515, 8
    %s521 = ssub.s32 15, %s515
    %s522 = smul.u32 %s521, 8
    %s523 = sshra.s32 %s520, 3
    %s524 = sand.u32 %s520, 7
    %s525 = smul.addr %s523, 4
    %s526 = scalar_lea.vmem [#allocation2], %s525
    %v527 = vld [vmem:[%s526] sm:$0xf]
    %v528 = vunpack.c.l.bf16 %v527
    %v529 = vld [vmem:[#allocation4] sm:$0xff]
    %v530 = vpack.c.bf16 %v529, %v529
    %v531 = vld [vmem:[%s2] sm:$0xf]
    %v532 = vld [vmem:[%s2 + $0x4] sm:$0xf]
    %v535 = vunpack.c.l.b16 %v531
    %v536 = vunpack.c.l.b16 %v532
    %v537 = vpack.c.b16 %v536, %v535
    %v540 = vsel %vm509, %v530, 0
    %542 = vmatprep.subr.bf16.mxu0 0
    %543 = vmatpush1.bf16.msra.mxu0 0
    %544 = vmatprep.subr.bf16.mxu0 0
    %545 = vmatpush1.bf16.msra.mxu0 0
    %546 = vmatprep.subr.bf16.mxu0 0
    %547 = vmatpush1.bf16.msra.mxu0 0
    %548 = vmatprep.subr.bf16.mxu0 0
    %549 = vmatpush1.bf16.msra.mxu0 0
    %550 = vmatprep.subr.bf16.mxu0 0
    %551 = vmatpush1.bf16.msra.mxu0 0
    %552 = vmatprep.subr.bf16.mxu0 0
    %553 = vmatpush1.bf16.msra.mxu0 0
    %554 = vmatprep.subr.bf16.mxu0 0
    %555 = vmatpush1.bf16.msra.mxu0 0
    %556 = vmatprep.subr.bf16.mxu0 0
    %557 = vmatpush1.bf16.msra.mxu0 %v537
    %558 = vmatprep.subr.bf16.mxu0 0
    %559 = vmatpush2.bf16.msra.mxu0 0
    %560 = vmatprep.subr.bf16.mxu0 0
    %561 = vmatpush2.bf16.msra.mxu0 0
    %562 = vmatprep.subr.bf16.mxu0 0
    %563 = vmatpush2.bf16.msra.mxu0 0
    %564 = vmatprep.subr.bf16.mxu0 0
    %565 = vmatpush2.bf16.msra.mxu0 0
    %566 = vmatprep.subr.bf16.mxu0 0
    %567 = vmatpush2.bf16.msra.mxu0 0
    %568 = vmatprep.subr.bf16.mxu0 0
    %569 = vmatpush2.bf16.msra.mxu0 0
    %570 = vmatprep.subr.bf16.mxu0 0
    %571 = vmatpush2.bf16.msra.mxu0 0
    %572 = vmatprep.subr.bf16.mxu0 0
    %573 = vmatpush2.bf16.msra.mxu0 0
    %574 = vmatprep.mubr.bf16.mxu0 0
    %575 = vmatmul.mubr.bf16.gmra.mxu0 %v540
    %v576 = vpop.f32.mrf.mxu0
    %v577 = vadd.f32 0.0, %v576
    %v578 = vpop.f32.mrf.mxu0
    %v579 = vpop.f32.mrf.mxu0
    %v580 = vpop.f32.mrf.mxu0
    %581 = vdwg.mxu0
    %v582 = vadd.f32 %v528, %v577
    %v583 = vld [vmem:[#allocation5] sm:$0xff]
    %v584 = vxor.u32 %v582, 2147483648
    %v585 = vmul.f32 %v584, 1.442695
    %v586 = vpow.pop %v585
    %v587 = vadd.f32 %v586, 1.0
    %v588 = vrcp.pop %v587
    %v589 = vmul.f32 1.0, %v588
    %v590 = vtanh.pop %v582
    %592 = vrot.lane.b32.xlu0 %v583, 16
    %v593 = vpop.permute.xlu0 %592
    %v595 = vmul.f32 %v589, %v593
    %597 = vrot.lane.b32.xlu0 %v590, 96
    %v598 = vpop.permute.xlu0 %597
    %v600 = vmul.f32 %v589, %v598
    %602 = vrot.lane.b32.xlu0 %v600, 16
    %v603 = vpop.permute.xlu0 %602
    %v605 = vadd.f32 %v595, %v603
    %v606 = vtanh.pop %v605
    %608 = vrot.lane.b32.xlu0 %v606, 32
    %v609 = vpop.permute.xlu0 %608
    %v611 = vmul.f32 %v589, %v609
    %613 = vrot.lane.b32.xlu0 %v611, 80
    %v614 = vpop.permute.xlu0 %613
    %616 = vst.msk [vmem:[#allocation4] sm:$0xff] %vm509, %v614
    %618 = vrot.lane.b32.xlu0 %v605, 112
    %v619 = vpop.permute.xlu0 %618
    %621 = vst.msk [vmem:[#allocation5] sm:$0xff] %vm509, %v619
    %v622 = vpack.c.bf16 %v611, %v611
    %v624 = vunpack.c.l.b16 %v622
    %v625 = vpack.c.b16 %v624, %v624
    %626 = vrot.lane.b32.xlu0 %v625, 80
    %v627 = vpop.permute.xlu0 %626
    %s629 = smul.addr %s523, 4
    %s630 = scalar_lea.vmem %s7, %s629
    %vm631 = vcmask 125952
    %632 = vst.msk [vmem:[%s630] sm:$0xf] %vm631, %v627
    %s633 = sshra.s32 %s522, 3
    %s634 = sand.u32 %s522, 7
    %s635 = smul.addr %s633, 4
    %s636 = scalar_lea.vmem [#allocation3], %s635
    %v637 = vld [vmem:[%s636] sm:$0xf]
    %v638 = vunpack.c.l.bf16 %v637
    %v639 = vld [vmem:[#allocation6] sm:$0xff]
    %v640 = vpack.c.bf16 %v639, %v639
    %v641 = vld [vmem:[%s5] sm:$0xf]
    %v642 = vld [vmem:[%s5 + $0x4] sm:$0xf]
    %v645 = vunpack.c.l.b16 %v641
    %v646 = vunpack.c.l.b16 %v642
    %v647 = vpack.c.b16 %v646, %v645
    %v650 = vsel %vm509, %v640, 0
    %652 = vmatprep.subr.bf16.mxu0 0
    %653 = vmatpush1.bf16.msra.mxu0 0
    %654 = vmatprep.subr.bf16.mxu0 0
    %655 = vmatpush1.bf16.msra.mxu0 0
    %656 = vmatprep.subr.bf16.mxu0 0
    %657 = vmatpush1.bf16.msra.mxu0 0
    %658 = vmatprep.subr.bf16.mxu0 0
    %659 = vmatpush1.bf16.msra.mxu0 0
    %660 = vmatprep.subr.bf16.mxu0 0
    %661 = vmatpush1.bf16.msra.mxu0 0
    %662 = vmatprep.subr.bf16.mxu0 0
    %663 = vmatpush1.bf16.msra.mxu0 0
    %664 = vmatprep.subr.bf16.mxu0 0
    %665 = vmatpush1.bf16.msra.mxu0 0
    %666 = vmatprep.subr.bf16.mxu0 0
    %667 = vmatpush1.bf16.msra.mxu0 %v647
    %668 = vmatprep.subr.bf16.mxu0 0
    %669 = vmatpush2.bf16.msra.mxu0 0
    %670 = vmatprep.subr.bf16.mxu0 0
    %671 = vmatpush2.bf16.msra.mxu0 0
    %672 = vmatprep.subr.bf16.mxu0 0
    %673 = vmatpush2.bf16.msra.mxu0 0
    %674 = vmatprep.subr.bf16.mxu0 0
    %675 = vmatpush2.bf16.msra.mxu0 0
    %676 = vmatprep.subr.bf16.mxu0 0
    %677 = vmatpush2.bf16.msra.mxu0 0
    %678 = vmatprep.subr.bf16.mxu0 0
    %679 = vmatpush2.bf16.msra.mxu0 0
    %680 = vmatprep.subr.bf16.mxu0 0
    %681 = vmatpush2.bf16.msra.mxu0 0
    %682 = vmatprep.subr.bf16.mxu0 0
    %683 = vmatpush2.bf16.msra.mxu0 0
    %684 = vmatprep.mubr.bf16.mxu0 0
    %685 = vmatmul.mubr.bf16.gmra.mxu0 %v650
    %v686 = vpop.f32.mrf.mxu0
    %v687 = vadd.f32 0.0, %v686
    %v688 = vpop.f32.mrf.mxu0
    %v689 = vpop.f32.mrf.mxu0
    %v690 = vpop.f32.mrf.mxu0
    %691 = vdwg.mxu0
    %v692 = vadd.f32 %v638, %v687
    %v693 = vld [vmem:[#allocation7] sm:$0xff]
    %v694 = vxor.u32 %v692, 2147483648
    %v695 = vmul.f32 %v694, 1.442695
    %v696 = vpow.pop %v695
    %v697 = vadd.f32 %v696, 1.0
    %v698 = vrcp.pop %v697
    %v699 = vmul.f32 1.0, %v698
    %v700 = vtanh.pop %v692
    %702 = vrot.lane.b32.xlu0 %v693, 16
    %v703 = vpop.permute.xlu0 %702
    %v705 = vmul.f32 %v699, %v703
    %707 = vrot.lane.b32.xlu0 %v700, 96
    %v708 = vpop.permute.xlu0 %707
    %v710 = vmul.f32 %v699, %v708
    %712 = vrot.lane.b32.xlu0 %v710, 16
    %v713 = vpop.permute.xlu0 %712
    %v715 = vadd.f32 %v705, %v713
    %v716 = vtanh.pop %v715
    %718 = vrot.lane.b32.xlu0 %v716, 32
    %v719 = vpop.permute.xlu0 %718
    %v721 = vmul.f32 %v699, %v719
    %723 = vrot.lane.b32.xlu0 %v721, 80
    %v724 = vpop.permute.xlu0 %723
    %726 = vst.msk [vmem:[#allocation6] sm:$0xff] %vm509, %v724
    %728 = vrot.lane.b32.xlu0 %v715, 112
    %v729 = vpop.permute.xlu0 %728
    %731 = vst.msk [vmem:[#allocation7] sm:$0xff] %vm509, %v729
    %v732 = vpack.c.bf16 %v721, %v721
    %v734 = vunpack.c.l.b16 %v732
    %v735 = vpack.c.b16 %v734, %v734
    %736 = vrot.lane.b32.xlu0 %v735, 96
    %v737 = vpop.permute.xlu0 %736
    %s739 = smul.addr %s633, 4
    %s740 = scalar_lea.vmem %s7, %s739
    %vm741 = vcmask 257152
    %742 = vst.msk [vmem:[%s740] sm:$0xf] %vm741, %v737
  $region34: #{tpu_custom_call.1} parent=0 // loop_footer
    %s519 = sadd.s32 1, %s515
  $region35: #{tpu_custom_call.1} parent=0 // loop_footer_branch
    %514 = sbr.rel target = $region31
  $region36: #{tpu_custom_call.1} parent=0 // loop_exit
    _
  // Predicated region
  $region37: #{tpu_custom_call.1} parent=0 // pred_check
    _
  $region38: #{tpu_custom_call.1} parent=0 // pred_check_branch
    %744 = sbr.rel (0) target = $region40
  $region39: #{tpu_custom_call.1} parent=0 // pred_region
    _
  $region40: #{tpu_custom_call.1} parent=0 // pred_fallthru
    _
  // Predicated region
  $region41: #{tpu_custom_call.1} parent=0 // pred_check
    _
  $region42: #{tpu_custom_call.1} parent=0 // pred_check_branch
    %746 = sbr.rel (0) target = $region44
  $region43: #{tpu_custom_call.1} parent=0 // pred_region
    _
  $region44: #{tpu_custom_call.1} parent=0 // pred_fallthru
    _

</llo_original>
